<compile_context>
chip_gen: v5e
topology: v5e:2x2
jax: 0.10.0
libtpu: 0.0.40
codegen_flags: <defaults>
</compile_context>

<pallas_src>
import math

import jax
import jax.numpy as jnp
from jax.experimental import pallas as pl
from jax.experimental.pallas import tpu as pltpu

_ALIGN_M = 16  # sublane alignment for bf16-packed batch tiles


def _round_up(x, m):
    return ((x + m - 1) // m) * m


def classifier_kernel(x1_ref, x2_ref, w_ref, b_ref, out_ref, m_ref):
    k = pl.program_id(2)
    tk = x1_ref.shape[1]

    x1 = x1_ref[...]                        # (tm, tk) bf16
    x2 = x2_ref[...]                        # (tm, tk) bf16
    x1f = x1.astype(jnp.float32)
    x2f = x2.astype(jnp.float32)

    # Merged LHS [x1, x2, |x1-x2|, x1*x2] in a VMEM scratch: four lane-aligned
    # static slices; derived features computed in f32 on the VPU, stored bf16.
    m_ref[:, 0 * tk:1 * tk] = x1
    m_ref[:, 1 * tk:2 * tk] = x2
    m_ref[:, 2 * tk:3 * tk] = jnp.abs(x1f - x2f).astype(m_ref.dtype)
    m_ref[:, 3 * tk:4 * tk] = (x1f * x2f).astype(m_ref.dtype)

    # One MXU matmul per grid step; the reduction over the 4 merged parts and
    # the D slice happens inside the MXU with an f32 accumulator.
    acc = jnp.dot(m_ref[...], w_ref[...], preferred_element_type=jnp.float32)

    @pl.when(k == 0)
    def _first():
        out_ref[...] = acc + b_ref[...]     # bias folded into the first write

    @pl.when(k > 0)
    def _rest():
        out_ref[...] += acc


def prepare_classifier_params(weight, bias, *, max_resident_k=1024, split_tk=512):
    """One-time (eval) param prep for `classifier_forward`.

    weight : (Y, 4*D) PyTorch nn.Linear weight.
    bias   : (Y,)     PyTorch nn.Linear bias.

    Returns (w_merged, b_pad, meta):
      w_merged : (4*D_p, Y_p) bf16, K-blocked so row block kb holds
                 [W0_kb; W1_kb; W2_kb; W3_kb] for the kb-th D slice.
      b_pad    : (1, Y_p) f32.
      meta     : static tiling info.
    """
    Y, D4 = weight.shape
    assert D4 % 4 == 0
    D = D4 // 4

    # Output (N) tiling: lane-dense; small heads collapse to a single 128 tile.
    Y_p = _round_up(Y, 128)
    tn = 256 if (Y_p % 256 == 0) else 128
    tn = min(tn, Y_p)

    # Reduction (K) tiling: keep the whole weight resident when it is small
    # (typical classifier head), otherwise split D into `split_tk` chunks.
    D_p = _round_up(D, 128)
    if D_p <= max_resident_k:
        tk = D_p
    else:
        tk = split_tk
        D_p = _round_up(D, tk)
    nk = D_p // tk

    # (Y, 4D) -> (4, D, Y), zero-pad, then K-block to (nk, 4, tk, Y_p) so the
    # kernel's (4*tk, tn) weight block k pairs exactly with the k-th D slice of
    # the merged LHS. Zero padding is exact (|0-0| = 0, 0*0 = 0).
    w4 = jnp.transpose(weight.reshape(Y, 4, D), (1, 2, 0))          # (4, D, Y)
    if (D_p, Y_p) != (D, Y):
        w4 = jnp.zeros((4, D_p, Y_p), w4.dtype).at[:, :D, :Y].set(w4)
    w_merged = (
        w4.reshape(4, nk, tk, Y_p)
          .transpose(1, 0, 2, 3)
          .reshape(4 * D_p, Y_p)
          .astype(jnp.bfloat16)
    )

    b_pad = jnp.zeros((1, Y_p), jnp.float32).at[0, :Y].set(bias.astype(jnp.float32))

    meta = dict(D=D, Y=Y, D_p=D_p, Y_p=Y_p, tk=tk, tn=tn, nk=nk)
    return w_merged, b_pad, meta


def classifier_forward(x1, x2, w_merged, b_pad, meta, *, tm=256):
    """Classifier forward (merge_opt=1, eval). Returns (B, Y) float32 scores."""
    B, D = x1.shape
    assert x2.shape == (B, D) and D == meta["D"]
    Y = meta["Y"]
    D_p, Y_p = meta["D_p"], meta["Y_p"]
    tk, tn, nk = meta["tk"], meta["tn"], meta["nk"]

    # --- batch (M) tiling: bound padding waste, keep bf16 sublane alignment ---
    tm = min(tm, _round_up(B, _ALIGN_M))
    if B > tm:                                   # rebalance so waste is small
        n_bt = -(-B // tm)
        tm = _round_up(-(-B // n_bt), _ALIGN_M)
    # If the grid would collapse to a single (i, j) tile, halve tm so both v7x
    # TensorCores get work (one extra grid step is negligible on v5e/v6e).
    if tm >= 2 * _ALIGN_M and (_round_up(B, tm) // tm) * (Y_p // tn) == 1:
        tm = _round_up(tm // 2, _ALIGN_M)
    B_p = _round_up(B, tm)

    dt = jnp.bfloat16

    def _pad_cast(a):
        a = a.astype(dt)
        if a.shape == (B_p, D_p):            # skip the padding copy if aligned
            return a
        return jnp.zeros((B_p, D_p), dt).at[:B, :D].set(a)

    x1_p = _pad_cast(x1)
    x2_p = _pad_cast(x2)

    grid = (B_p // tm, Y_p // tn, nk)        # reduction axis last

    flops = 2 * B * (4 * D) * Y + 3 * B * D             # 4D matmul + merge math
    bytes_accessed = (2 * 2 * B * D                     # bf16 activations
                      + 2 * 4 * D * Y                   # bf16 weight (read once)
                      + 4 * Y                           # f32 bias
                      + 4 * B * Y)                      # f32 output

    out_p = pl.pallas_call(
        classifier_kernel,
        out_shape=jax.ShapeDtypeStruct((B_p, Y_p), jnp.float32),
        grid_spec=pltpu.PrefetchScalarGridSpec(
            num_scalar_prefetch=0,
            grid=grid,
            in_specs=[
                pl.BlockSpec((tm, tk), lambda i, j, k: (i, k)),        # x1
                pl.BlockSpec((tm, tk), lambda i, j, k: (i, k)),        # x2
                pl.BlockSpec((4 * tk, tn), lambda i, j, k: (k, j)),    # merged W
                pl.BlockSpec((1, tn), lambda i, j, k: (0, j)),         # bias
            ],
            out_specs=pl.BlockSpec((tm, tn), lambda i, j, k: (i, j)),
            scratch_shapes=[pltpu.VMEM((tm, 4 * tk), dt)],             # merged LHS
        ),
        compiler_params=pltpu.CompilerParams(
            dimension_semantics=("parallel", "parallel", "arbitrary"),
        ),
        cost_estimate=pl.CostEstimate(
            flops=flops, transcendentals=0, bytes_accessed=bytes_accessed),
    )(x1_p, x2_p, w_merged, b_pad)

    return out_p[:B, :Y]


if __name__ == "__main__":
    # Small shapes consistent with the module: batch=2, x_size=32, y_size=8
    B, D, Y = 2, 32, 8

    key = jax.random.PRNGKey(0)
    k1, k2, kw, kb = jax.random.split(key, 4)

    x1 = jax.random.normal(k1, (B, D), dtype=jnp.float32)
    x2 = jax.random.normal(k2, (B, D), dtype=jnp.float32)

    # PyTorch nn.Linear(4*D, Y) params: weight (Y, 4D), bias (Y,)
    bound = 1.0 / math.sqrt(4.0 * D)
    weight = jax.random.uniform(kw, (Y, 4 * D), minval=-bound, maxval=bound,
                                dtype=jnp.float32)
    bias = jax.random.uniform(kb, (Y,), minval=-bound, maxval=bound,
                              dtype=jnp.float32)

    # One-time weight prep (eval), then the kernel call.
    w_merged, b_pad, meta = prepare_classifier_params(weight, bias)
    out = classifier_forward(x1, x2, w_merged, b_pad, meta)
    out = jax.block_until_ready(out)

    # Reference mirroring the kernel's bf16-operand / f32-accumulate numerics.
    f32 = jnp.float32
    x1b = x1.astype(jnp.bfloat16).astype(f32)
    x2b = x2.astype(jnp.bfloat16).astype(f32)
    d_b = jnp.abs(x1b - x2b).astype(jnp.bfloat16).astype(f32)
    p_b = (x1b * x2b).astype(jnp.bfloat16).astype(f32)
    merged_ref = jnp.concatenate([x1b, x2b, d_b, p_b], axis=1)
    w_b = weight.astype(jnp.bfloat16).astype(f32)
    ref = merged_ref @ w_b.T + bias

    assert out.shape == (B, Y)
    assert out.dtype == jnp.float32
    assert jnp.allclose(out, ref, atol=2e-3, rtol=2e-3)

    # Loose sanity check against the exact f32 PyTorch forward.
    ref_f32 = (jnp.concatenate([x1, x2, jnp.abs(x1 - x2), x1 * x2], axis=1)
               @ weight.T + bias)
    assert jnp.allclose(out, ref_f32, atol=1e-1, rtol=1e-1)

    print("KERNEL_OK")
</pallas_src>

<mosaic_0001>
module attributes {stable_mosaic.version = 11 : i64} {
  func.func @classifier_kernel(%arg0: i32, %arg1: i32, %arg2: i32, %arg3: memref<16x128xbf16, #tpu.memory_space<vmem>>, %arg4: memref<16x128xbf16, #tpu.memory_space<vmem>>, %arg5: memref<512x128xbf16, #tpu.memory_space<vmem>>, %arg6: memref<1x128xf32, #tpu.memory_space<vmem>>, %arg7: memref<16x128xf32, #tpu.memory_space<vmem>>, %arg8: memref<16x512xbf16, #tpu.memory_space<vmem>>) attributes {dimension_semantics = [#tpu.dimension_semantics<parallel>, #tpu.dimension_semantics<parallel>, #tpu.dimension_semantics<arbitrary>], iteration_bounds = array<i64: 1, 1, 1>, scalar_prefetch = 0 : i64, scratch_operands = 1 : i64, tpu.core_type = #tpu.core_type<tc>, window_params = [{transform_indices = @transform_0, window_bounds = array<i64: 16, 128>}, {transform_indices = @transform_1, window_bounds = array<i64: 16, 128>}, {transform_indices = @transform_2, window_bounds = array<i64: 512, 128>}, {transform_indices = @transform_3, window_bounds = array<i64: 1, 128>}, {transform_indices = @transform_4, window_bounds = array<i64: 16, 128>}]} {
    %c0 = arith.constant 0 : index
    %c0_0 = arith.constant 0 : index
    %0 = vector.load %arg3[%c0, %c0_0] : memref<16x128xbf16, #tpu.memory_space<vmem>>, vector<16x128xbf16>
    %c0_1 = arith.constant 0 : index
    %c0_2 = arith.constant 0 : index
    %1 = vector.load %arg4[%c0_1, %c0_2] : memref<16x128xbf16, #tpu.memory_space<vmem>>, vector<16x128xbf16>
    %2 = arith.extf %0 : vector<16x128xbf16> to vector<16x128xf32>
    %3 = arith.extf %1 : vector<16x128xbf16> to vector<16x128xf32>
    %c0_3 = arith.constant 0 : index
    %c0_4 = arith.constant 0 : index
    %4 = vector.load %arg8[%c0_3, %c0_4] : memref<16x512xbf16, #tpu.memory_space<vmem>>, vector<16x128xbf16>
    tpu.vector_store %arg8[%c0_3, %c0_4], %0 {strides = array<i32>} : memref<16x512xbf16, #tpu.memory_space<vmem>>, vector<16x128xbf16>,
    %c0_5 = arith.constant 0 : index
    %c128 = arith.constant 128 : index
    %5 = vector.load %arg8[%c0_5, %c128] : memref<16x512xbf16, #tpu.memory_space<vmem>>, vector<16x128xbf16>
    tpu.vector_store %arg8[%c0_5, %c128], %1 {strides = array<i32>} : memref<16x512xbf16, #tpu.memory_space<vmem>>, vector<16x128xbf16>,
    %6 = arith.subf %2, %3 : vector<16x128xf32>
    %7 = math.absf %6 : vector<16x128xf32>
    %8 = arith.truncf %7 : vector<16x128xf32> to vector<16x128xbf16>
    %c0_6 = arith.constant 0 : index
    %c256 = arith.constant 256 : index
    %9 = vector.load %arg8[%c0_6, %c256] : memref<16x512xbf16, #tpu.memory_space<vmem>>, vector<16x128xbf16>
    tpu.vector_store %arg8[%c0_6, %c256], %8 {strides = array<i32>} : memref<16x512xbf16, #tpu.memory_space<vmem>>, vector<16x128xbf16>,
    %10 = arith.mulf %2, %3 : vector<16x128xf32>
    %11 = arith.truncf %10 : vector<16x128xf32> to vector<16x128xbf16>
    %c0_7 = arith.constant 0 : index
    %c384 = arith.constant 384 : index
    %12 = vector.load %arg8[%c0_7, %c384] : memref<16x512xbf16, #tpu.memory_space<vmem>>, vector<16x128xbf16>
    tpu.vector_store %arg8[%c0_7, %c384], %11 {strides = array<i32>} : memref<16x512xbf16, #tpu.memory_space<vmem>>, vector<16x128xbf16>,
    %c0_8 = arith.constant 0 : index
    %c0_9 = arith.constant 0 : index
    %13 = vector.load %arg8[%c0_8, %c0_9] : memref<16x512xbf16, #tpu.memory_space<vmem>>, vector<16x512xbf16>
    %c0_10 = arith.constant 0 : index
    %c0_11 = arith.constant 0 : index
    %14 = vector.load %arg5[%c0_10, %c0_11] : memref<512x128xbf16, #tpu.memory_space<vmem>>, vector<512x128xbf16>
    %cst = arith.constant dense<0.000000e+00> : vector<16x128xf32>
    %15 = tpu.matmul %13, %14, %cst {dimension_numbers = #tpu.dot_dimension_numbers<[1], [0], [0], [1], [0, 0, 1, 1], [], []>} : vector<16x512xbf16>, vector<512x128xbf16>, vector<16x128xf32> -> vector<16x128xf32>
    %c0_i32 = arith.constant 0 : i32
    %16 = arith.cmpi eq, %arg2, %c0_i32 : i32
    %17 = arith.extui %16 : i1 to i32
    %c0_i32_12 = arith.constant 0 : i32
    %18 = arith.cmpi ne, %17, %c0_i32_12 : i32
    scf.if %18 {
      %c0_15 = arith.constant 0 : index
      %c0_16 = arith.constant 0 : index
      %22 = vector.load %arg6[%c0_15, %c0_16] : memref<1x128xf32, #tpu.memory_space<vmem>>, vector<1x128xf32>
      %23 = vector.broadcast %22 : vector<1x128xf32> to vector<16x128xf32>
      %24 = arith.addf %15, %23 : vector<16x128xf32>
      %c0_17 = arith.constant 0 : index
      %c0_18 = arith.constant 0 : index
      %25 = vector.load %arg7[%c0_17, %c0_18] : memref<16x128xf32, #tpu.memory_space<vmem>>, vector<16x128xf32>
      tpu.vector_store %arg7[%c0_17, %c0_18], %24 {strides = array<i32>} : memref<16x128xf32, #tpu.memory_space<vmem>>, vector<16x128xf32>,
    } else {
    }
    %c0_i32_13 = arith.constant 0 : i32
    %19 = arith.cmpi sgt, %arg2, %c0_i32_13 : i32
    %20 = arith.extui %19 : i1 to i32
    %c0_i32_14 = arith.constant 0 : i32
    %21 = arith.cmpi ne, %20, %c0_i32_14 : i32
    scf.if %21 {
      %c0_15 = arith.constant 0 : index
      %c0_16 = arith.constant 0 : index
      %22 = vector.load %arg7[%c0_15, %c0_16] : memref<16x128xf32, #tpu.memory_space<vmem>>, vector<16x128xf32>
      %23 = arith.addf %22, %15 : vector<16x128xf32>
      %c0_17 = arith.constant 0 : index
      %c0_18 = arith.constant 0 : index
      %24 = vector.load %arg7[%c0_17, %c0_18] : memref<16x128xf32, #tpu.memory_space<vmem>>, vector<16x128xf32>
      tpu.vector_store %arg7[%c0_17, %c0_18], %23 {strides = array<i32>} : memref<16x128xf32, #tpu.memory_space<vmem>>, vector<16x128xf32>,
    } else {
    }
    return
  }
  func.func @transform_0(%arg0: i32, %arg1: i32, %arg2: i32) -> (i32, i32) {
    %c0_i32 = arith.constant 0 : i32
    return %arg0, %arg2 : i32, i32
  }
  func.func @transform_1(%arg0: i32, %arg1: i32, %arg2: i32) -> (i32, i32) {
    %c0_i32 = arith.constant 0 : i32
    return %arg0, %arg2 : i32, i32
  }
  func.func @transform_2(%arg0: i32, %arg1: i32, %arg2: i32) -> (i32, i32) {
    %c0_i32 = arith.constant 0 : i32
    return %arg2, %arg1 : i32, i32
  }
  func.func @transform_3(%arg0: i32, %arg1: i32, %arg2: i32) -> (i32, i32) {
    %c0_i32 = arith.constant 0 : i32
    %c0_i32_0 = arith.constant 0 : i32
    return %c0_i32, %arg1 : i32, i32
  }
  func.func @transform_4(%arg0: i32, %arg1: i32, %arg2: i32) -> (i32, i32) {
    %c0_i32 = arith.constant 0 : i32
    return %arg0, %arg1 : i32, i32
  }
}

</mosaic_0001>

<llo_original>
// kernel: tpu_custom_call.1
$region0: #{tpu_custom_call.1}
  #allocation0 [shape = 'u32[]', space=smem, size = 0x4, offset = 0x4, fixed_abs, tag = 'smem constant byte address 0x4 - core index']
  #allocation1 [shape = 'u32[72,128]{1,0:T(1,128)}', space=vmem, size = 0x9000, scoped, tag = 'internal scratch']
  #allocation2 [shape = 'bf16[16,512]{1,0:T(8,128)(2,1)}', space=vmem, size = 0x4000, scoped, tag = 'scratch operand']
  %s0 = inlined_call_operand.hbm [shape: bf16[16,128], index: 0, kind: input, shape index: {}]
  %s1 = inlined_call_operand.hbm [shape: bf16[16,128], index: 1, kind: input, shape index: {}]
  %s2 = inlined_call_operand.hbm [shape: bf16[512,128], index: 2, kind: input, shape index: {}]
  %s3 = inlined_call_operand.vmem [shape: f32[1,128], index: 3, kind: input, shape index: {}]
  %s4 = inlined_call_operand.hbm [shape: f32[16,128], index: 4, kind: output, shape index: {}]
  %s5 = sld [smem:[#allocation0]]
  $region46: #{tpu_custom_call.1} parent=0
    _
  %s7 = ssub.s32 1, %s5
  %s8 = scalar_select 0, %s7, %s5
  $region1: #{tpu_custom_call.1} parent=0
    #allocation3 [shape = 'u8[4096]{0}', space=vmem, size = 0x1000, scoped, tag = 'input window, operand 0, single buffered']
    #allocation4 [shape = 's32[1]{0}', space=sflag, size = 0x4, scoped, tag = 'scoped memory for tpu_custom_call.1']
    #allocation5 [shape = 's32[1]{0}', space=sflag, size = 0x4, scoped, tag = 'scoped memory for tpu_custom_call.1']
    #allocation6 [shape = 'u8[4096]{0}', space=vmem, size = 0x1000, scoped, tag = 'input window, operand 1, single buffered']
    #allocation7 [shape = 's32[1]{0}', space=sflag, size = 0x4, scoped, tag = 'scoped memory for tpu_custom_call.1']
    #allocation8 [shape = 'u8[131072]{0}', space=vmem, size = 0x20000, scoped, tag = 'input window, operand 2, single buffered']
    #allocation9 [shape = 'u8[8192]{0}', space=vmem, size = 0x2000, scoped, tag = 'output window, operand 0, single buffered']
    %9 = vsyncpa [#allocation4], 0
    %10 = vsyncpa [#allocation7], 0
    %11 = vsyncpa [#allocation5], 0
    // Predicated region
    $region2: #{tpu_custom_call.1} parent=1 // pred_check
      _
    $region3: #{tpu_custom_call.1} parent=1 // pred_check_branch
      %13 = sbr.rel (0) target = $region5
    $region4: #{tpu_custom_call.1} parent=1 // pred_region
      %15 = vsyncadd [#allocation4], 0
      %s16 = sshll.u32 %s0, 4
      %s17 = int_to_ptr.hbm [resolvable:$true] %s16
      %s18 = sshll.u32 [#allocation3], 4
      %s19 = int_to_ptr.vmem [resolvable:$true] %s18
      %24 = dma.hbm_to_vmem [thread:$0]  %s17, 128, %s19, [#allocation4], 64, 64, 4
    $region5: #{tpu_custom_call.1} parent=1 // pred_fallthru
      _
    // Predicated region
    $region6: #{tpu_custom_call.1} parent=1 // pred_check
      _
    $region7: #{tpu_custom_call.1} parent=1 // pred_check_branch
      %26 = sbr.rel (0) target = $region9
    $region8: #{tpu_custom_call.1} parent=1 // pred_region
      %28 = vsyncadd [#allocation7], 0
      %s29 = sshll.u32 %s1, 4
      %s30 = int_to_ptr.hbm [resolvable:$true] %s29
      %s31 = sshll.u32 [#allocation6], 4
      %s32 = int_to_ptr.vmem [resolvable:$true] %s31
      %37 = dma.hbm_to_vmem [thread:$0]  %s30, 128, %s32, [#allocation7], 64, 64, 4
    $region9: #{tpu_custom_call.1} parent=1 // pred_fallthru
      _
    // Predicated region
    $region10: #{tpu_custom_call.1} parent=1 // pred_check
      _
    $region11: #{tpu_custom_call.1} parent=1 // pred_check_branch
      %39 = sbr.rel (0) target = $region13
    $region12: #{tpu_custom_call.1} parent=1 // pred_region
      %41 = vsyncadd [#allocation7], 0
      %s42 = sshll.u32 %s2, 4
      %s43 = int_to_ptr.hbm [resolvable:$true] %s42
      %s44 = sshll.u32 [#allocation8], 4
      %s45 = int_to_ptr.vmem [resolvable:$true] %s44
      %50 = dma.hbm_to_vmem [thread:$0]  %s43, 4096, %s45, [#allocation7], 64, 64, 4
    $region13: #{tpu_custom_call.1} parent=1 // pred_fallthru
      _
    // Predicated region
    $region14: #{tpu_custom_call.1} parent=1 // pred_check
      _
    $region15: #{tpu_custom_call.1} parent=1 // pred_check_branch
      %52 = sbr.rel (0) target = $region17
    $region16: #{tpu_custom_call.1} parent=1 // pred_region
      _
    $region17: #{tpu_custom_call.1} parent=1 // pred_fallthru
      _
    // Predicated region
    $region18: #{tpu_custom_call.1} parent=1 // pred_check
      _
    $region19: #{tpu_custom_call.1} parent=1 // pred_check_branch
      %54 = sbr.rel (0) target = $region21
    $region20: #{tpu_custom_call.1} parent=1 // pred_region
      %56 = dma.done [#allocation4], 128
    $region21: #{tpu_custom_call.1} parent=1 // pred_fallthru
      _
    // Predicated region
    $region22: #{tpu_custom_call.1} parent=1 // pred_check
      _
    $region23: #{tpu_custom_call.1} parent=1 // pred_check_branch
      %58 = sbr.rel (0) target = $region25
    $region24: #{tpu_custom_call.1} parent=1 // pred_region
      %60 = dma.done [#allocation7], 128
    $region25: #{tpu_custom_call.1} parent=1 // pred_fallthru
      _
    // Predicated region
    $region26: #{tpu_custom_call.1} parent=1 // pred_check
      _
    $region27: #{tpu_custom_call.1} parent=1 // pred_check_branch
      %62 = sbr.rel (0) target = $region29
    $region28: #{tpu_custom_call.1} parent=1 // pred_region
      %64 = dma.done [#allocation7], 4096
    $region29: #{tpu_custom_call.1} parent=1 // pred_fallthru
      _
    %v65 = vld [vmem:[#allocation3] sm:$0xf]
    %v66 = vld [vmem:[#allocation3 + $0x4] sm:$0xf]
    %v67 = vld [vmem:[#allocation6] sm:$0xf]
    %v68 = vld [vmem:[#allocation6 + $0x4] sm:$0xf]
    %v69 = vunpack.c.l.bf16 %v65
    %v70 = vunpack.c.l.bf16 %v66
    %v71 = vunpack.c.l.bf16 %v67
    %v72 = vunpack.c.l.bf16 %v68
    %73 = vst [vmem:[#allocation2] sm:$0xf] %v65
    %74 = vst [vmem:[#allocation2 + $0x10] sm:$0xf] %v66
    %75 = vst [vmem:[#allocation2 + $0x4] sm:$0xf] %v67
    %76 = vst [vmem:[#allocation2 + $0x14] sm:$0xf] %v68
    %v77 = vsub.f32 %v69, %v71
    %v78 = vsub.f32 %v70, %v72
    %v79 = vand.u32 2147483647, %v77
    %v80 = vand.u32 2147483647, %v78
    %v81 = vpack.c.bf16 %v79, %v79
    %v82 = vpack.c.bf16 %v80, %v80
    %83 = vst [vmem:[#allocation2 + $0x8] sm:$0xf] %v81
    %84 = vst [vmem:[#allocation2 + $0x18] sm:$0xf] %v82
    %v85 = vmul.f32 %v69, %v71
    %v86 = vmul.f32 %v70, %v72
    %v87 = vpack.c.bf16 %v85, %v85
    %v88 = vpack.c.bf16 %v86, %v86
    %89 = vst [vmem:[#allocation2 + $0xc] sm:$0xf] %v87
    %90 = vst [vmem:[#allocation2 + $0x1c] sm:$0xf] %v88
    %v91 = vld [vmem:[#allocation2] sm:$0xff]
    %v92 = vld [vmem:[#allocation2 + $0x8] sm:$0xff]
    %v93 = vld [vmem:[#allocation2 + $0x10] sm:$0xff]
    %v94 = vld [vmem:[#allocation2 + $0x18] sm:$0xff]
    %v95 = vld [vmem:[#allocation8] sm:$0xf]
    %v96 = vld [vmem:[#allocation8 + $0x4] sm:$0xf]
    %v97 = vld [vmem:[#allocation8 + $0x8] sm:$0xf]
    %v98 = vld [vmem:[#allocation8 + $0xc] sm:$0xf]
    %v99 = vld [vmem:[#allocation8 + $0x10] sm:$0xf]
    %v100 = vld [vmem:[#allocation8 + $0x14] sm:$0xf]
    %v101 = vld [vmem:[#allocation8 + $0x18] sm:$0xf]
    %v102 = vld [vmem:[#allocation8 + $0x1c] sm:$0xf]
    %v103 = vld [vmem:[#allocation8 + $0x20] sm:$0xf]
    %v104 = vld [vmem:[#allocation8 + $0x24] sm:$0xf]
    %v105 = vld [vmem:[#allocation8 + $0x28] sm:$0xf]
    %v106 = vld [vmem:[#allocation8 + $0x2c] sm:$0xf]
    %v107 = vld [vmem:[#allocation8 + $0x30] sm:$0xf]
    %v108 = vld [vmem:[#allocation8 + $0x34] sm:$0xf]
    %v109 = vld [vmem:[#allocation8 + $0x38] sm:$0xf]
    %v110 = vld [vmem:[#allocation8 + $0x3c] sm:$0xf]
    %v111 = vld [vmem:[#allocation8 + $0x40] sm:$0xf]
    %v112 = vld [vmem:[#allocation8 + $0x44] sm:$0xf]
    %v113 = vld [vmem:[#allocation8 + $0x48] sm:$0xf]
    %v114 = vld [vmem:[#allocation8 + $0x4c] sm:$0xf]
    %v115 = vld [vmem:[#allocation8 + $0x50] sm:$0xf]
    %v116 = vld [vmem:[#allocation8 + $0x54] sm:$0xf]
    %v117 = vld [vmem:[#allocation8 + $0x58] sm:$0xf]
    %v118 = vld [vmem:[#allocation8 + $0x5c] sm:$0xf]
    %v119 = vld [vmem:[#allocation8 + $0x60] sm:$0xf]
    %v120 = vld [vmem:[#allocation8 + $0x64] sm:$0xf]
    %v121 = vld [vmem:[#allocation8 + $0x68] sm:$0xf]
    %v122 = vld [vmem:[#allocation8 + $0x6c] sm:$0xf]
    %v123 = vld [vmem:[#allocation8 + $0x70] sm:$0xf]
    %v124 = vld [vmem:[#allocation8 + $0x74] sm:$0xf]
    %v125 = vld [vmem:[#allocation8 + $0x78] sm:$0xf]
    %v126 = vld [vmem:[#allocation8 + $0x7c] sm:$0xf]
    %v127 = vld [vmem:[#allocation8 + $0x80] sm:$0xf]
    %v128 = vld [vmem:[#allocation8 + $0x84] sm:$0xf]
    %v129 = vld [vmem:[#allocation8 + $0x88] sm:$0xf]
    %v130 = vld [vmem:[#allocation8 + $0x8c] sm:$0xf]
    %v131 = vld [vmem:[#allocation8 + $0x90] sm:$0xf]
    %v132 = vld [vmem:[#allocation8 + $0x94] sm:$0xf]
    %v133 = vld [vmem:[#allocation8 + $0x98] sm:$0xf]
    %v134 = vld [vmem:[#allocation8 + $0x9c] sm:$0xf]
    %v135 = vld [vmem:[#allocation8 + $0xa0] sm:$0xf]
    %v136 = vld [vmem:[#allocation8 + $0xa4] sm:$0xf]
    %v137 = vld [vmem:[#allocation8 + $0xa8] sm:$0xf]
    %v138 = vld [vmem:[#allocation8 + $0xac] sm:$0xf]
    %v139 = vld [vmem:[#allocation8 + $0xb0] sm:$0xf]
    %v140 = vld [vmem:[#allocation8 + $0xb4] sm:$0xf]
    %v141 = vld [vmem:[#allocation8 + $0xb8] sm:$0xf]
    %v142 = vld [vmem:[#allocation8 + $0xbc] sm:$0xf]
    %v143 = vld [vmem:[#allocation8 + $0xc0] sm:$0xf]
    %v144 = vld [vmem:[#allocation8 + $0xc4] sm:$0xf]
    %v145 = vld [vmem:[#allocation8 + $0xc8] sm:$0xf]
    %v146 = vld [vmem:[#allocation8 + $0xcc] sm:$0xf]
    %v147 = vld [vmem:[#allocation8 + $0xd0] sm:$0xf]
    %v148 = vld [vmem:[#allocation8 + $0xd4] sm:$0xf]
    %v149 = vld [vmem:[#allocation8 + $0xd8] sm:$0xf]
    %v150 = vld [vmem:[#allocation8 + $0xdc] sm:$0xf]
    %v151 = vld [vmem:[#allocation8 + $0xe0] sm:$0xf]
    %v152 = vld [vmem:[#allocation8 + $0xe4] sm:$0xf]
    %v153 = vld [vmem:[#allocation8 + $0xe8] sm:$0xf]
    %v154 = vld [vmem:[#allocation8 + $0xec] sm:$0xf]
    %v155 = vld [vmem:[#allocation8 + $0xf0] sm:$0xf]
    %v156 = vld [vmem:[#allocation8 + $0xf4] sm:$0xf]
    %v157 = vld [vmem:[#allocation8 + $0xf8] sm:$0xf]
    %v158 = vld [vmem:[#allocation8 + $0xfc] sm:$0xf]
    %v163 = vunpack.c.l.b16 %v91
    %v164 = vunpack.c.h.b16 %v91
    %v165 = vunpack.c.l.b16 %v92
    %v166 = vunpack.c.h.b16 %v92
    %v167 = vunpack.c.l.b16 %v93
    %v168 = vunpack.c.h.b16 %v93
    %v169 = vunpack.c.l.b16 %v94
    %v170 = vunpack.c.h.b16 %v94
    %v171 = vpack.c.b16 %v167, %v163
    %v172 = vpack.c.b16 %v168, %v164
    %v173 = vpack.c.b16 %v169, %v165
    %v174 = vpack.c.b16 %v170, %v166
    %v243 = vunpack.c.l.b16 %v95
    %v244 = vunpack.c.l.b16 %v96
    %v245 = vunpack.c.l.b16 %v97
    %v246 = vunpack.c.l.b16 %v98
    %v247 = vunpack.c.l.b16 %v99
    %v248 = vunpack.c.l.b16 %v100
    %v249 = vunpack.c.l.b16 %v101
    %v250 = vunpack.c.l.b16 %v102
    %v251 = vunpack.c.l.b16 %v103
    %v252 = vunpack.c.l.b16 %v104
    %v253 = vunpack.c.l.b16 %v105
    %v254 = vunpack.c.l.b16 %v106
    %v255 = vunpack.c.l.b16 %v107
    %v256 = vunpack.c.l.b16 %v108
    %v257 = vunpack.c.l.b16 %v109
    %v258 = vunpack.c.l.b16 %v110
    %v259 = vunpack.c.l.b16 %v111
    %v260 = vunpack.c.l.b16 %v112
    %v261 = vunpack.c.l.b16 %v113
    %v262 = vunpack.c.l.b16 %v114
    %v263 = vunpack.c.l.b16 %v115
    %v264 = vunpack.c.l.b16 %v116
    %v265 = vunpack.c.l.b16 %v117
    %v266 = vunpack.c.l.b16 %v118
    %v267 = vunpack.c.l.b16 %v119
    %v268 = vunpack.c.l.b16 %v120
    %v269 = vunpack.c.l.b16 %v121
    %v270 = vunpack.c.l.b16 %v122
    %v271 = vunpack.c.l.b16 %v123
    %v272 = vunpack.c.l.b16 %v124
    %v273 = vunpack.c.l.b16 %v125
    %v274 = vunpack.c.l.b16 %v126
    %v275 = vunpack.c.l.b16 %v127
    %v276 = vunpack.c.l.b16 %v128
    %v277 = vunpack.c.l.b16 %v129
    %v278 = vunpack.c.l.b16 %v130
    %v279 = vunpack.c.l.b16 %v131
    %v280 = vunpack.c.l.b16 %v132
    %v281 = vunpack.c.l.b16 %v133
    %v282 = vunpack.c.l.b16 %v134
    %v283 = vunpack.c.l.b16 %v135
    %v284 = vunpack.c.l.b16 %v136
    %v285 = vunpack.c.l.b16 %v137
    %v286 = vunpack.c.l.b16 %v138
    %v287 = vunpack.c.l.b16 %v139
    %v288 = vunpack.c.l.b16 %v140
    %v289 = vunpack.c.l.b16 %v141
    %v290 = vunpack.c.l.b16 %v142
    %v291 = vunpack.c.l.b16 %v143
    %v292 = vunpack.c.l.b16 %v144
    %v293 = vunpack.c.l.b16 %v145
    %v294 = vunpack.c.l.b16 %v146
    %v295 = vunpack.c.l.b16 %v147
    %v296 = vunpack.c.l.b16 %v148
    %v297 = vunpack.c.l.b16 %v149
    %v298 = vunpack.c.l.b16 %v150
    %v299 = vunpack.c.l.b16 %v151
    %v300 = vunpack.c.l.b16 %v152
    %v301 = vunpack.c.l.b16 %v153
    %v302 = vunpack.c.l.b16 %v154
    %v303 = vunpack.c.l.b16 %v155
    %v304 = vunpack.c.l.b16 %v156
    %v305 = vunpack.c.l.b16 %v157
    %v306 = vunpack.c.l.b16 %v158
    %v307 = vpack.c.b16 %v244, %v243
    %v308 = vpack.c.b16 %v246, %v245
    %v309 = vpack.c.b16 %v248, %v247
    %v310 = vpack.c.b16 %v250, %v249
    %v311 = vpack.c.b16 %v252, %v251
    %v312 = vpack.c.b16 %v254, %v253
    %v313 = vpack.c.b16 %v256, %v255
    %v314 = vpack.c.b16 %v258, %v257
    %v315 = vpack.c.b16 %v260, %v259
    %v316 = vpack.c.b16 %v262, %v261
    %v317 = vpack.c.b16 %v264, %v263
    %v318 = vpack.c.b16 %v266, %v265
    %v319 = vpack.c.b16 %v268, %v267
    %v320 = vpack.c.b16 %v270, %v269
    %v321 = vpack.c.b16 %v272, %v271
    %v322 = vpack.c.b16 %v274, %v273
    %v323 = vpack.c.b16 %v276, %v275
    %v324 = vpack.c.b16 %v278, %v277
    %v325 = vpack.c.b16 %v280, %v279
    %v326 = vpack.c.b16 %v282, %v281
    %v327 = vpack.c.b16 %v284, %v283
    %v328 = vpack.c.b16 %v286, %v285
    %v329 = vpack.c.b16 %v288, %v287
    %v330 = vpack.c.b16 %v290, %v289
    %v331 = vpack.c.b16 %v292, %v291
    %v332 = vpack.c.b16 %v294, %v293
    %v333 = vpack.c.b16 %v296, %v295
    %v334 = vpack.c.b16 %v298, %v297
    %v335 = vpack.c.b16 %v300, %v299
    %v336 = vpack.c.b16 %v302, %v301
    %v337 = vpack.c.b16 %v304, %v303
    %v338 = vpack.c.b16 %v306, %v305
    %371 = vmatpush.bf16.msra.mxu0 %v314
    %372 = vmatpush.bf16.msra.mxu0 %v313
    %373 = vmatpush.bf16.msra.mxu0 %v312
    %374 = vmatpush.bf16.msra.mxu0 %v311
    %375 = vmatpush.bf16.msra.mxu0 %v310
    %376 = vmatpush.bf16.msra.mxu0 %v309
    %377 = vmatpush.bf16.msra.mxu0 %v308
    %378 = vmatpush.bf16.msra.mxu0 %v307
    %379 = vmatmul.bf16.gmra.mxu0 %v171
    %v380 = vpop.f32.mrf.mxu0
    %v381 = vadd.f32 0.0, %v380
    %v382 = vpop.f32.mrf.mxu0
    %v383 = vadd.f32 0.0, %v382
    %384 = vdwg.mxu0
    %385 = vmatpush.bf16.msra.mxu0 %v322
    %386 = vmatpush.bf16.msra.mxu0 %v321
    %387 = vmatpush.bf16.msra.mxu0 %v320
    %388 = vmatpush.bf16.msra.mxu0 %v319
    %389 = vmatpush.bf16.msra.mxu0 %v318
    %390 = vmatpush.bf16.msra.mxu0 %v317
    %391 = vmatpush.bf16.msra.mxu0 %v316
    %392 = vmatpush.bf16.msra.mxu0 %v315
    %393 = vmatmul.bf16.gmra.mxu0 %v172
    %v394 = vpop.f32.mrf.mxu0
    %v395 = vadd.f32 %v381, %v394
    %v396 = vpop.f32.mrf.mxu0
    %v397 = vadd.f32 %v383, %v396
    %398 = vdwg.mxu0
    %399 = vmatpush.bf16.msra.mxu0 %v330
    %400 = vmatpush.bf16.msra.mxu0 %v329
    %401 = vmatpush.bf16.msra.mxu0 %v328
    %402 = vmatpush.bf16.msra.mxu0 %v327
    %403 = vmatpush.bf16.msra.mxu0 %v326
    %404 = vmatpush.bf16.msra.mxu0 %v325
    %405 = vmatpush.bf16.msra.mxu0 %v324
    %406 = vmatpush.bf16.msra.mxu0 %v323
    %407 = vmatmul.bf16.gmra.mxu0 %v173
    %v408 = vpop.f32.mrf.mxu0
    %v409 = vadd.f32 %v395, %v408
    %v410 = vpop.f32.mrf.mxu0
    %v411 = vadd.f32 %v397, %v410
    %412 = vdwg.mxu0
    %413 = vmatpush.bf16.msra.mxu0 %v338
    %414 = vmatpush.bf16.msra.mxu0 %v337
    %415 = vmatpush.bf16.msra.mxu0 %v336
    %416 = vmatpush.bf16.msra.mxu0 %v335
    %417 = vmatpush.bf16.msra.mxu0 %v334
    %418 = vmatpush.bf16.msra.mxu0 %v333
    %419 = vmatpush.bf16.msra.mxu0 %v332
    %420 = vmatpush.bf16.msra.mxu0 %v331
    %421 = vmatmul.bf16.gmra.mxu0 %v174
    %v422 = vpop.f32.mrf.mxu0
    %v423 = vadd.f32 %v409, %v422
    %v424 = vpop.f32.mrf.mxu0
    %v425 = vadd.f32 %v411, %v424
    %426 = vdwg.mxu0
    %p427 = scmp.eq.s32.totalorder 0, 0
    // Predicated region
    $region30: #{tpu_custom_call.1} parent=1 // pred_check
      %p428 = pneg %p427
    $region31: #{tpu_custom_call.1} parent=1 // pred_check_branch
      %430 = sbr.rel (%p428) target = $region33
    $region32: #{tpu_custom_call.1} parent=1 // pred_region
      %v431 = vld [vmem:[%s3] sm:$0x1]
      %v433 = vperm.slane %v431, 0
      %v435 = vadd.f32 %v423, %v433
      %v436 = vadd.f32 %v425, %v433
      %437 = vst [vmem:[#allocation9] sm:$0xff] %v435
      %438 = vst [vmem:[#allocation9 + $0x8] sm:$0xff] %v436
    $region33: #{tpu_custom_call.1} parent=1 // pred_fallthru
      _
    %p439 = scmp.gt.s32.totalorder 0, 0
    // Predicated region
    $region34: #{tpu_custom_call.1} parent=1 // pred_check
      %p440 = pneg %p439
    $region35: #{tpu_custom_call.1} parent=1 // pred_check_branch
      %442 = sbr.rel (%p440) target = $region37
    $region36: #{tpu_custom_call.1} parent=1 // pred_region
      %v443 = vld [vmem:[#allocation9] sm:$0xff]
      %v444 = vld [vmem:[#allocation9 + $0x8] sm:$0xff]
      %v445 = vadd.f32 %v443, %v423
      %v446 = vadd.f32 %v444, %v425
      %447 = vst [vmem:[#allocation9] sm:$0xff] %v445
      %448 = vst [vmem:[#allocation9 + $0x8] sm:$0xff] %v446
    $region37: #{tpu_custom_call.1} parent=1 // pred_fallthru
      _
    // Predicated region
    $region38: #{tpu_custom_call.1} parent=1 // pred_check
      _
    $region39: #{tpu_custom_call.1} parent=1 // pred_check_branch
      %450 = sbr.rel (0) target = $region41
    $region40: #{tpu_custom_call.1} parent=1 // pred_region
      %452 = vsyncadd [#allocation5], 0
      %s453 = sshll.u32 [#allocation9], 4
      %s454 = int_to_ptr.vmem [resolvable:$true] %s453
      %s455 = sshll.u32 %s4, 4
      %s456 = int_to_ptr.hbm [resolvable:$true] %s455
      %461 = dma.vmem_to_hbm [thread:$0]  %s454, 256, %s456, [#allocation5], 128, 128, 8
    $region41: #{tpu_custom_call.1} parent=1 // pred_fallthru
      _
    // Predicated region
    $region42: #{tpu_custom_call.1} parent=1 // pred_check
      _
    $region43: #{tpu_custom_call.1} parent=1 // pred_check_branch
      %463 = sbr.rel (0) target = $region45
    $region44: #{tpu_custom_call.1} parent=1 // pred_region
      %465 = dma.done [#allocation5], 256
    $region45: #{tpu_custom_call.1} parent=1 // pred_fallthru
      _
    %466 = vsyncpa [#allocation4], 1
    %467 = vsyncpa [#allocation7], 1
    %468 = vsyncpa [#allocation5], 1

</llo_original>
